<compile_context>
chip_gen: v5e
topology: v5e:2x2
jax: 0.10.0
libtpu: 0.0.40
codegen_flags: <defaults>
</compile_context>

<pallas_src>
import jax
import jax.numpy as jnp
from jax.experimental import pallas as pl
from jax.experimental.pallas import tpu as pltpu

IN_FEATURES = 42
H1, H2, OUT = 12, 4, 1


def _round_up(n, m):
    return ((n + m - 1) // m) * m


def lin_kernel(x_ref, w1_ref, b1_ref, w2_ref, b2_ref, w3_ref, b3_ref, o_ref):
    # x_ref: (42, TN)  -- batch on the lane axis, features on sublanes.
    x = x_ref[...]

    # Linear(42 -> 12) + ReLU   : (12,42) @ (42,TN) -> (12,TN)
    h1 = jnp.dot(w1_ref[...], x, preferred_element_type=jnp.float32) + b1_ref[...]
    h1 = jnp.maximum(h1, 0.0)

    # TODO(synk): Dropout(p=0.2) is identity at inference; train-mode RNG masking omitted.

    # Linear(12 -> 4) + ReLU    : (4,12) @ (12,TN) -> (4,TN)
    h2 = jnp.dot(w2_ref[...], h1, preferred_element_type=jnp.float32) + b2_ref[...]
    h2 = jnp.maximum(h2, 0.0)

    # Linear(4 -> 1)            : (1,4) @ (4,TN) -> (1,TN)   (lane-dense output)
    out = jnp.dot(w3_ref[...], h2, preferred_element_type=jnp.float32) + b3_ref[...]
    o_ref[...] = out.astype(o_ref.dtype)


def lin_forward(x, params, *, tn=512):
    """x: (N, ...) with prod(trailing dims) == 42 (matches nn.Flatten)."""
    w1, b1, w2, b2, w3, b3 = params
    N = x.shape[0]
    xf = x.reshape(N, -1).astype(jnp.float32)                # Flatten
    assert xf.shape[1] == IN_FEATURES, f"expected 42 features, got {xf.shape[1]}"

    # Tile the batch on the lane axis; pad batch to a multiple of the tile.
    tn_eff = min(tn, max(128, _round_up(N, 128)))
    n_pad = _round_up(N, tn_eff)
    xt = jnp.zeros((IN_FEATURES, n_pad), jnp.float32).at[:, :N].set(xf.T)

    grid = (n_pad // tn_eff,)
    out = pl.pallas_call(
        lin_kernel,
        out_shape=jax.ShapeDtypeStruct((1, n_pad), jnp.float32),
        grid_spec=pltpu.PrefetchScalarGridSpec(
            num_scalar_prefetch=0,
            grid=grid,
            in_specs=[
                pl.BlockSpec((IN_FEATURES, tn_eff), lambda i: (0, i)),  # x (42, TN)
                pl.BlockSpec((H1, IN_FEATURES), lambda i: (0, 0)),      # w1 (12, 42)
                pl.BlockSpec((H1, 1), lambda i: (0, 0)),                # b1 (12, 1)
                pl.BlockSpec((H2, H1), lambda i: (0, 0)),               # w2 (4, 12)
                pl.BlockSpec((H2, 1), lambda i: (0, 0)),                # b2 (4, 1)
                pl.BlockSpec((OUT, H2), lambda i: (0, 0)),              # w3 (1, 4)
                pl.BlockSpec((OUT, 1), lambda i: (0, 0)),               # b3 (1, 1)
            ],
            out_specs=pl.BlockSpec((1, tn_eff), lambda i: (0, i)),      # (1, TN)
        ),
        compiler_params=pltpu.CompilerParams(
            dimension_semantics=("parallel",)),
    )(
        xt,
        w1, b1.reshape(H1, 1),
        w2, b2.reshape(H2, 1),
        w3, b3.reshape(OUT, 1),
    )
    # Back to PyTorch layout (N, 1), dropping batch padding.
    return out[0, :N].reshape(N, 1)


def lin_reference(x, params):
    """Pure-JAX reference mirroring the PyTorch forward (inference mode)."""
    w1, b1, w2, b2, w3, b3 = params
    xf = x.reshape(x.shape[0], -1)
    h1 = jnp.maximum(xf @ w1.T + b1, 0.0)
    h2 = jnp.maximum(h1 @ w2.T + b2, 0.0)
    return h2 @ w3.T + b3


def init_params(key):
    """Deterministic synthetic parameters (PyTorch-like uniform fan-in init)."""
    ks = jax.random.split(key, 6)

    def u(k, shape, fan_in):
        bound = 1.0 / fan_in ** 0.5
        return jax.random.uniform(k, shape, jnp.float32, -bound, bound)

    w1 = u(ks[0], (H1, IN_FEATURES), IN_FEATURES)
    b1 = u(ks[1], (H1,), IN_FEATURES)
    w2 = u(ks[2], (H2, H1), H1)
    b2 = u(ks[3], (H2,), H1)
    w3 = u(ks[4], (OUT, H2), H2)
    b3 = u(ks[5], (OUT,), H2)
    return (w1, b1, w2, b2, w3, b3)


if __name__ == "__main__":
    key = jax.random.PRNGKey(0)
    pkey, xkey = jax.random.split(key)
    params = init_params(pkey)

    # N=2, spatial (6, 7) -> Flatten -> 42 features -> 12 -> 4 -> 1
    x = jax.random.normal(xkey, (2, 6, 7), jnp.float32)

    out = lin_forward(x, params)
    out = jax.block_until_ready(out)

    ref = lin_reference(x, params)
    assert out.shape == (2, 1)
    assert jnp.allclose(out, ref, atol=1e-5, rtol=1e-5), (out, ref)

    print("KERNEL_OK")
</pallas_src>

<mosaic_0001>
module attributes {stable_mosaic.version = 11 : i64} {
  func.func @lin_kernel(%arg0: i32, %arg1: memref<42x128xf32, #tpu.memory_space<vmem>>, %arg2: memref<12x42xf32, #tpu.memory_space<vmem>>, %arg3: memref<12x1xf32, #tpu.memory_space<vmem>>, %arg4: memref<4x12xf32, #tpu.memory_space<vmem>>, %arg5: memref<4x1xf32, #tpu.memory_space<vmem>>, %arg6: memref<1x4xf32, #tpu.memory_space<vmem>>, %arg7: memref<1x1xf32, #tpu.memory_space<vmem>>, %arg8: memref<1x128xf32, #tpu.memory_space<vmem>>) attributes {dimension_semantics = [#tpu.dimension_semantics<parallel>], iteration_bounds = array<i64: 1>, scalar_prefetch = 0 : i64, scratch_operands = 0 : i64, tpu.core_type = #tpu.core_type<tc>, window_params = [{transform_indices = @transform_0, window_bounds = array<i64: 42, 128>}, {pipeline_mode = #tpu.pipeline_mode<synchronous>, transform_indices = @transform_1, window_bounds = array<i64: 12, 42>}, {pipeline_mode = #tpu.pipeline_mode<synchronous>, transform_indices = @transform_2, window_bounds = array<i64: 12, 1>}, {pipeline_mode = #tpu.pipeline_mode<synchronous>, transform_indices = @transform_3, window_bounds = array<i64: 4, 12>}, {pipeline_mode = #tpu.pipeline_mode<synchronous>, transform_indices = @transform_4, window_bounds = array<i64: 4, 1>}, {pipeline_mode = #tpu.pipeline_mode<synchronous>, transform_indices = @transform_5, window_bounds = array<i64: 1, 4>}, {pipeline_mode = #tpu.pipeline_mode<synchronous>, transform_indices = @transform_6, window_bounds = array<i64: 1, 1>}, {transform_indices = @transform_7, window_bounds = array<i64: 1, 128>}]} {
    %c0 = arith.constant 0 : index
    %c0_0 = arith.constant 0 : index
    %0 = vector.load %arg1[%c0, %c0_0] : memref<42x128xf32, #tpu.memory_space<vmem>>, vector<42x128xf32>
    %c0_1 = arith.constant 0 : index
    %c0_2 = arith.constant 0 : index
    %1 = vector.load %arg2[%c0_1, %c0_2] : memref<12x42xf32, #tpu.memory_space<vmem>>, vector<12x42xf32>
    %cst = arith.constant dense<0.000000e+00> : vector<12x128xf32>
    %2 = tpu.matmul %1, %0, %cst {dimension_numbers = #tpu.dot_dimension_numbers<[1], [0], [0], [1], [0, 0, 1, 1], [], []>} : vector<12x42xf32>, vector<42x128xf32>, vector<12x128xf32> -> vector<12x128xf32>
    %c0_3 = arith.constant 0 : index
    %c0_4 = arith.constant 0 : index
    %3 = vector.load %arg3[%c0_3, %c0_4] : memref<12x1xf32, #tpu.memory_space<vmem>>, vector<12x1xf32>
    %4 = vector.broadcast %3 : vector<12x1xf32> to vector<12x128xf32>
    %5 = arith.addf %2, %4 : vector<12x128xf32>
    %cst_5 = arith.constant 0.000000e+00 : f32
    %6 = vector.broadcast %cst_5 : f32 to vector<12x128xf32>
    %7 = arith.maximumf %5, %6 : vector<12x128xf32>
    %c0_6 = arith.constant 0 : index
    %c0_7 = arith.constant 0 : index
    %8 = vector.load %arg4[%c0_6, %c0_7] : memref<4x12xf32, #tpu.memory_space<vmem>>, vector<4x12xf32>
    %cst_8 = arith.constant dense<0.000000e+00> : vector<4x128xf32>
    %9 = tpu.matmul %8, %7, %cst_8 {dimension_numbers = #tpu.dot_dimension_numbers<[1], [0], [0], [1], [0, 0, 1, 1], [], []>} : vector<4x12xf32>, vector<12x128xf32>, vector<4x128xf32> -> vector<4x128xf32>
    %c0_9 = arith.constant 0 : index
    %c0_10 = arith.constant 0 : index
    %10 = vector.load %arg5[%c0_9, %c0_10] : memref<4x1xf32, #tpu.memory_space<vmem>>, vector<4x1xf32>
    %11 = vector.broadcast %10 : vector<4x1xf32> to vector<4x128xf32>
    %12 = arith.addf %9, %11 : vector<4x128xf32>
    %cst_11 = arith.constant 0.000000e+00 : f32
    %13 = vector.broadcast %cst_11 : f32 to vector<4x128xf32>
    %14 = arith.maximumf %12, %13 : vector<4x128xf32>
    %c0_12 = arith.constant 0 : index
    %c0_13 = arith.constant 0 : index
    %15 = vector.load %arg6[%c0_12, %c0_13] : memref<1x4xf32, #tpu.memory_space<vmem>>, vector<1x4xf32>
    %cst_14 = arith.constant dense<0.000000e+00> : vector<1x128xf32>
    %16 = tpu.matmul %15, %14, %cst_14 {dimension_numbers = #tpu.dot_dimension_numbers<[1], [0], [0], [1], [0, 0, 1, 1], [], []>} : vector<1x4xf32>, vector<4x128xf32>, vector<1x128xf32> -> vector<1x128xf32>
    %c0_15 = arith.constant 0 : index
    %c0_16 = arith.constant 0 : index
    %17 = vector.load %arg7[%c0_15, %c0_16] : memref<1x1xf32, #tpu.memory_space<vmem>>, vector<1x1xf32>
    %18 = vector.broadcast %17 : vector<1x1xf32> to vector<1x128xf32>
    %19 = arith.addf %16, %18 : vector<1x128xf32>
    %c0_17 = arith.constant 0 : index
    %c0_18 = arith.constant 0 : index
    %20 = vector.load %arg8[%c0_17, %c0_18] : memref<1x128xf32, #tpu.memory_space<vmem>>, vector<1x128xf32>
    tpu.vector_store %arg8[%c0_17, %c0_18], %19 {strides = array<i32>} : memref<1x128xf32, #tpu.memory_space<vmem>>, vector<1x128xf32>,
    return
  }
  func.func @transform_0(%arg0: i32) -> (i32, i32) {
    %c0_i32 = arith.constant 0 : i32
    %c0_i32_0 = arith.constant 0 : i32
    return %c0_i32, %arg0 : i32, i32
  }
  func.func @transform_1(%arg0: i32) -> (i32, i32) {
    %c0_i32 = arith.constant 0 : i32
    %c0_i32_0 = arith.constant 0 : i32
    %c0_i32_1 = arith.constant 0 : i32
    return %c0_i32, %c0_i32_0 : i32, i32
  }
  func.func @transform_2(%arg0: i32) -> (i32, i32) {
    %c0_i32 = arith.constant 0 : i32
    %c0_i32_0 = arith.constant 0 : i32
    %c0_i32_1 = arith.constant 0 : i32
    return %c0_i32, %c0_i32_0 : i32, i32
  }
  func.func @transform_3(%arg0: i32) -> (i32, i32) {
    %c0_i32 = arith.constant 0 : i32
    %c0_i32_0 = arith.constant 0 : i32
    %c0_i32_1 = arith.constant 0 : i32
    return %c0_i32, %c0_i32_0 : i32, i32
  }
  func.func @transform_4(%arg0: i32) -> (i32, i32) {
    %c0_i32 = arith.constant 0 : i32
    %c0_i32_0 = arith.constant 0 : i32
    %c0_i32_1 = arith.constant 0 : i32
    return %c0_i32, %c0_i32_0 : i32, i32
  }
  func.func @transform_5(%arg0: i32) -> (i32, i32) {
    %c0_i32 = arith.constant 0 : i32
    %c0_i32_0 = arith.constant 0 : i32
    %c0_i32_1 = arith.constant 0 : i32
    return %c0_i32, %c0_i32_0 : i32, i32
  }
  func.func @transform_6(%arg0: i32) -> (i32, i32) {
    %c0_i32 = arith.constant 0 : i32
    %c0_i32_0 = arith.constant 0 : i32
    %c0_i32_1 = arith.constant 0 : i32
    return %c0_i32, %c0_i32_0 : i32, i32
  }
  func.func @transform_7(%arg0: i32) -> (i32, i32) {
    %c0_i32 = arith.constant 0 : i32
    %c0_i32_0 = arith.constant 0 : i32
    return %c0_i32, %arg0 : i32, i32
  }
}

</mosaic_0001>

<llo_original>
// kernel: tpu_custom_call.1
$region0: #{tpu_custom_call.1}
  #allocation0 [shape = 'u32[]', space=smem, size = 0x4, offset = 0x4, fixed_abs, tag = 'smem constant byte address 0x4 - core index']
  #allocation1 [shape = 'u32[72,128]{1,0:T(1,128)}', space=vmem, size = 0x9000, scoped, tag = 'internal scratch']
  #allocation2 [shape = 'f32[1,1]{1,0:T(1,128)S(1)}', space=vmem, size = 0x200, scoped, tag = 'scoped memory for tpu_custom_call.1']
  %s0 = inlined_call_operand.hbm [shape: f32[42,128], index: 0, kind: input, shape index: {}]
  %s1 = inlined_call_operand.vmem [shape: f32[12,42], index: 1, kind: input, shape index: {}]
  %s2 = inlined_call_operand.vmem [shape: f32[12,1], index: 2, kind: input, shape index: {}]
  %s3 = inlined_call_operand.vmem [shape: f32[4,12], index: 3, kind: input, shape index: {}]
  %s4 = inlined_call_operand.vmem [shape: f32[4,1], index: 4, kind: input, shape index: {}]
  %s5 = inlined_call_operand.vmem [shape: f32[1,4], index: 5, kind: input, shape index: {}]
  %s6 = inlined_call_operand.<no memory space> [shape: f32[1,1], index: 6, kind: input, shape index: {}]
  %s7 = inlined_call_operand.hbm [shape: f32[1,128], index: 7, kind: output, shape index: {}]
  %s8 = sld [smem:[#allocation0]]
  $region42: #{tpu_custom_call.1} parent=0
    _
  %s10 = ssub.s32 1, %s8
  %s11 = scalar_select 0, %s10, %s8
  %v12 = vstv %s6
  %13 = vst [vmem:[#allocation2] sm:$0x1] %v12
  $region1: #{tpu_custom_call.1} parent=0
    #allocation3 [shape = 'u8[24576]{0}', space=vmem, size = 0x6000, scoped, tag = 'input window, operand 0, single buffered']
    #allocation4 [shape = 's32[1]{0}', space=sflag, size = 0x4, scoped, tag = 'scoped memory for tpu_custom_call.1']
    #allocation5 [shape = 's32[1]{0}', space=sflag, size = 0x4, scoped, tag = 'scoped memory for tpu_custom_call.1']
    #allocation6 [shape = 'u8[512]{0}', space=vmem, size = 0x400, scoped, tag = 'output window, operand 0, single buffered']
    %14 = vsyncpa [#allocation4], 0
    %15 = vsyncpa [#allocation5], 0
    // Predicated region
    $region2: #{tpu_custom_call.1} parent=1 // pred_check
      _
    $region3: #{tpu_custom_call.1} parent=1 // pred_check_branch
      %17 = sbr.rel (0) target = $region5
    $region4: #{tpu_custom_call.1} parent=1 // pred_region
      %19 = vsyncadd [#allocation4], 0
      %s20 = sshll.u32 %s0, 4
      %s21 = int_to_ptr.hbm [resolvable:$true] %s20
      %s22 = sshll.u32 [#allocation3], 4
      %s23 = int_to_ptr.vmem [resolvable:$true] %s22
      %28 = dma.hbm_to_vmem [thread:$0]  %s21, 768, %s23, [#allocation4], 128, 128, 8
    $region5: #{tpu_custom_call.1} parent=1 // pred_fallthru
      _
    // Predicated region
    $region6: #{tpu_custom_call.1} parent=1 // pred_check
      _
    $region7: #{tpu_custom_call.1} parent=1 // pred_check_branch
      %30 = sbr.rel (0) target = $region9
    $region8: #{tpu_custom_call.1} parent=1 // pred_region
      _
    $region9: #{tpu_custom_call.1} parent=1 // pred_fallthru
      _
    // Predicated region
    $region10: #{tpu_custom_call.1} parent=1 // pred_check
      _
    $region11: #{tpu_custom_call.1} parent=1 // pred_check_branch
      %32 = sbr.rel (0) target = $region13
    $region12: #{tpu_custom_call.1} parent=1 // pred_region
      _
    $region13: #{tpu_custom_call.1} parent=1 // pred_fallthru
      _
    // Predicated region
    $region14: #{tpu_custom_call.1} parent=1 // pred_check
      _
    $region15: #{tpu_custom_call.1} parent=1 // pred_check_branch
      %34 = sbr.rel (0) target = $region17
    $region16: #{tpu_custom_call.1} parent=1 // pred_region
      _
    $region17: #{tpu_custom_call.1} parent=1 // pred_fallthru
      _
    // Predicated region
    $region18: #{tpu_custom_call.1} parent=1 // pred_check
      _
    $region19: #{tpu_custom_call.1} parent=1 // pred_check_branch
      %36 = sbr.rel (0) target = $region21
    $region20: #{tpu_custom_call.1} parent=1 // pred_region
      _
    $region21: #{tpu_custom_call.1} parent=1 // pred_fallthru
      _
    // Predicated region
    $region22: #{tpu_custom_call.1} parent=1 // pred_check
      _
    $region23: #{tpu_custom_call.1} parent=1 // pred_check_branch
      %38 = sbr.rel (0) target = $region25
    $region24: #{tpu_custom_call.1} parent=1 // pred_region
      _
    $region25: #{tpu_custom_call.1} parent=1 // pred_fallthru
      _
    // Predicated region
    $region26: #{tpu_custom_call.1} parent=1 // pred_check
      _
    $region27: #{tpu_custom_call.1} parent=1 // pred_check_branch
      %40 = sbr.rel (0) target = $region29
    $region28: #{tpu_custom_call.1} parent=1 // pred_region
      _
    $region29: #{tpu_custom_call.1} parent=1 // pred_fallthru
      _
    // Predicated region
    $region30: #{tpu_custom_call.1} parent=1 // pred_check
      _
    $region31: #{tpu_custom_call.1} parent=1 // pred_check_branch
      %42 = sbr.rel (0) target = $region33
    $region32: #{tpu_custom_call.1} parent=1 // pred_region
      %44 = dma.done [#allocation4], 768
    $region33: #{tpu_custom_call.1} parent=1 // pred_fallthru
      _
    %v45 = vld [vmem:[#allocation3] sm:$0xff]
    %v46 = vld [vmem:[#allocation3 + $0x8] sm:$0xff]
    %v47 = vld [vmem:[#allocation3 + $0x10] sm:$0xff]
    %v48 = vld [vmem:[#allocation3 + $0x18] sm:$0xff]
    %v49 = vld [vmem:[#allocation3 + $0x20] sm:$0xff]
    %v50 = vld [vmem:[#allocation3 + $0x28] sm:$0x3]
    %v51 = vld [vmem:[%s1] sm:$0xff]
    %v52 = vld [vmem:[%s1 + $0x8] sm:$0xf]
    %v53 = vld [vmem:[%s2] sm:$0xff]
    %v54 = vld [vmem:[%s2 + $0x8] sm:$0xf]
    %56 = vset.pattern.permute.xlu0 0
    %57 = vperm.xlu0 %56, %v53
    %v58 = vpop.permute.xlu0 %57
    %61 = vset.pattern.permute.xlu0 0
    %62 = vperm.xlu0 %61, %v54
    %v63 = vpop.permute.xlu0 %62
    %vm65 = vcmask 343040
    %v67 = vsel %vm65, %v51, 0
    %v70 = vsel %vm65, %v52, 0
    %vm72 = vcmask 1041408
    %v74 = vsel %vm72, %v50, 0
    %76 = vmatpush.msra.mxu0 0.0
    %77 = vmatpush.msra.mxu0 0.0
    %78 = vmatpush.msra.mxu0 0.0
    %79 = vmatpush.msra.mxu0 0.0
    %80 = vmatpush.msra.mxu0 0.0
    %81 = vmatpush.msra.mxu0 0.0
    %82 = vmatpush.msra.mxu0 0.0
    %83 = vmatpush.msra.mxu0 0.0
    %84 = vmatpush.msra.mxu0 0.0
    %85 = vmatpush.msra.mxu0 0.0
    %86 = vmatpush.msra.mxu0 %v74
    %87 = vmatpush.msra.mxu0 %v49
    %88 = vmatpush.msra.mxu0 %v48
    %89 = vmatpush.msra.mxu0 %v47
    %90 = vmatpush.msra.mxu0 %v46
    %91 = vmatpush.msra.mxu0 %v45
    %92 = vmatmul.f32.gmra.mxu0 %v67
    %v93 = vpop.f32.mrf.mxu0
    %v94 = vadd.f32 %v58, %v93
    %95 = vmatmul.f32.gmra.mxu0 %v70
    %v96 = vpop.f32.mrf.mxu0
    %v97 = vadd.f32 %v63, %v96
    %98 = vdwg.mxu0
    %v99 = vmax.f32 %v94, 0.0
    %v100 = vmax.f32 %v97, 0.0
    %v101 = vld [vmem:[%s3] sm:$0xf]
    %v102 = vld [vmem:[%s4] sm:$0xf]
    %104 = vset.pattern.permute.xlu0 0
    %105 = vperm.xlu0 %104, %v102
    %v106 = vpop.permute.xlu0 %105
    %vm108 = vcmask 97280
    %v110 = vsel %vm108, %v101, 0
    %vm112 = vcmask 1043456
    %v114 = vsel %vm112, %v100, 0
    %116 = vmatpush.msra.mxu0 0.0
    %117 = vmatpush.msra.mxu0 0.0
    %118 = vmatpush.msra.mxu0 0.0
    %119 = vmatpush.msra.mxu0 0.0
    %120 = vmatpush.msra.mxu0 0.0
    %121 = vmatpush.msra.mxu0 0.0
    %122 = vmatpush.msra.mxu0 0.0
    %123 = vmatpush.msra.mxu0 0.0
    %124 = vmatpush.msra.mxu0 0.0
    %125 = vmatpush.msra.mxu0 0.0
    %126 = vmatpush.msra.mxu0 0.0
    %127 = vmatpush.msra.mxu0 0.0
    %128 = vmatpush.msra.mxu0 0.0
    %129 = vmatpush.msra.mxu0 0.0
    %130 = vmatpush.msra.mxu0 %v114
    %131 = vmatpush.msra.mxu0 %v99
    %132 = vmatmul.f32.gmra.mxu0 %v110
    %v133 = vpop.f32.mrf.mxu0
    %v134 = vadd.f32 %v106, %v133
    %135 = vdwg.mxu0
    %v136 = vmax.f32 %v134, 0.0
    %v137 = vld [vmem:[%s5] sm:$0x1]
    %v138 = vld [vmem:[#allocation2] sm:$0x1]
    %140 = vset.pattern.permute.xlu0 0
    %141 = vperm.xlu0 %140, %v138
    %v142 = vpop.permute.xlu0 %141
    %v144 = vperm.slane %v142, 0
    %vm145 = vcmask 31744
    %v147 = vsel %vm145, %v137, 0
    %v150 = vsel %vm112, %v136, 0
    %152 = vmatpush.msra.mxu0 0.0
    %153 = vmatpush.msra.mxu0 0.0
    %154 = vmatpush.msra.mxu0 0.0
    %155 = vmatpush.msra.mxu0 0.0
    %156 = vmatpush.msra.mxu0 0.0
    %157 = vmatpush.msra.mxu0 0.0
    %158 = vmatpush.msra.mxu0 0.0
    %159 = vmatpush.msra.mxu0 0.0
    %160 = vmatpush.msra.mxu0 0.0
    %161 = vmatpush.msra.mxu0 0.0
    %162 = vmatpush.msra.mxu0 0.0
    %163 = vmatpush.msra.mxu0 0.0
    %164 = vmatpush.msra.mxu0 0.0
    %165 = vmatpush.msra.mxu0 0.0
    %166 = vmatpush.msra.mxu0 0.0
    %167 = vmatpush.msra.mxu0 %v150
    %168 = vmatmul.f32.gmra.mxu0 %v147
    %v169 = vpop.f32.mrf.mxu0
    %v170 = vadd.f32 %v144, %v169
    %171 = vdwg.mxu0
    %172 = vst [vmem:[#allocation6] sm:$0x1] %v170
    // Predicated region
    $region34: #{tpu_custom_call.1} parent=1 // pred_check
      _
    $region35: #{tpu_custom_call.1} parent=1 // pred_check_branch
      %174 = sbr.rel (0) target = $region37
    $region36: #{tpu_custom_call.1} parent=1 // pred_region
      %176 = vsyncadd [#allocation5], 0
      %s178 = sshll.u32 [#allocation6], 4
      %s179 = int_to_ptr.vmem [resolvable:$true] %s178
      %s180 = sshll.u32 %s7, 4
      %s181 = int_to_ptr.hbm [resolvable:$true] %s180
      %183 = dma.vmem_to_hbm [thread:$0]  %s179, 16, %s181, [#allocation5]
    $region37: #{tpu_custom_call.1} parent=1 // pred_fallthru
      _
    // Predicated region
    $region38: #{tpu_custom_call.1} parent=1 // pred_check
      _
    $region39: #{tpu_custom_call.1} parent=1 // pred_check_branch
      %185 = sbr.rel (0) target = $region41
    $region40: #{tpu_custom_call.1} parent=1 // pred_region
      %187 = dma.done [#allocation5], 16
    $region41: #{tpu_custom_call.1} parent=1 // pred_fallthru
      _
    %188 = vsyncpa [#allocation4], 1
    %189 = vsyncpa [#allocation5], 1

</llo_original>
